<compile_context>
chip_gen: v5e
topology: v5e:2x2
jax: 0.10.0
libtpu: 0.0.40
codegen_flags: <defaults>
</compile_context>

<pallas_src>
import jax
import jax.numpy as jnp
from jax.experimental import pallas as pl
from jax.experimental.pallas import tpu as pltpu


_K = 736     # fc1 fan-in (flattened phase-1 features)
_N1 = 256    # fc1 fan-out
_N2 = 8      # fc2 fan-out


def _round_up(x, m):
    return (x + m - 1) // m * m


# ---------------------------------------------------------------------------
# Pallas kernel: single fused Linear  (x @ W12 + b12), all f32
# ---------------------------------------------------------------------------
def _head_kernel(x_ref, w_ref, b_ref, o_ref):
    o_ref[...] = (
        jnp.dot(x_ref[...], w_ref[...], preferred_element_type=jnp.float32)
        + b_ref[...]
    )


# ---------------------------------------------------------------------------
# One-time parameter fusion (fc1 -> fc2 collapses since there is no activation)
# ---------------------------------------------------------------------------
def fuse_head_params(w1, b1, w2, b2):
    """Returns W12 = W1 @ W2 (736, 8) and b12 = b1 @ W2 + b2 (1, 8), in f32."""
    w1 = w1.astype(jnp.float32)
    w2 = w2.astype(jnp.float32)
    b1 = b1.astype(jnp.float32).reshape(1, _N1)
    b2 = b2.astype(jnp.float32).reshape(1, _N2)
    w12 = jnp.dot(w1, w2, precision=jax.lax.Precision.HIGHEST)
    b12 = jnp.dot(b1, w2, precision=jax.lax.Precision.HIGHEST) + b2
    return w12, b12


# ---------------------------------------------------------------------------
# Wrapper
# ---------------------------------------------------------------------------
def expnet_p2_forward(x_nchw, w12, b12):
    """ExpNet_p2 head: flatten -> (fc1;fc2) fused as one Linear(736 -> 8).

    x_nchw: (B, C, H, W) phase-1 output feature map with C*H*W == 736.
    w12/b12: fused parameters from `fuse_head_params`.
    Returns f32 (B, 8).
    """
    B = x_nchw.shape[0]
    x = x_nchw.reshape(B, -1).astype(jnp.float32)   # row-major == torch .view on NCHW
    assert x.shape[1] == _K and w12.shape == (_K, _N2) and b12.shape == (1, _N2)

    # Pad batch only up to the f32 sublane multiple (8) -- negligible traffic.
    b_pad = _round_up(B, 8)
    if b_pad != B:
        x = jnp.pad(x, ((0, b_pad - B), (0, 0)))

    # >= 2 grid steps whenever possible (engages both v7x TensorCores), capped at
    # 1024 rows/tile; boundary block may be partial (handled by masked DMA).
    tile_b = min(1024, max(8, _round_up(pl.cdiv(b_pad, 2), 8)))
    grid = (pl.cdiv(b_pad, tile_b),)

    out = pl.pallas_call(
        _head_kernel,
        out_shape=jax.ShapeDtypeStruct((b_pad, _N2), jnp.float32),
        grid=grid,
        in_specs=[
            # activations: pipelined (double-buffered) over the batch grid
            pl.BlockSpec((tile_b, _K), lambda i: (i, 0)),
            # fused weight / bias: constant index_map -> stay VMEM-resident
            pl.BlockSpec((_K, _N2), lambda i: (0, 0)),
            pl.BlockSpec((1, _N2), lambda i: (0, 0)),
        ],
        out_specs=pl.BlockSpec((tile_b, _N2), lambda i: (i, 0)),
        compiler_params=pltpu.CompilerParams(
            dimension_semantics=("parallel",)),   # shard batch tiles across v7x TCs
    )(x, w12, b12)

    return out[:B]


# ---------------------------------------------------------------------------
# Deterministic parameter init (mimics nn.Linear default: U(-1/sqrt(fan_in), ..))
# ---------------------------------------------------------------------------
def init_params(key):
    k1, k2, k3, k4 = jax.random.split(key, 4)
    lim1 = 1.0 / jnp.sqrt(_K)
    lim2 = 1.0 / jnp.sqrt(_N1)
    # stored already transposed to (in, out) for x @ W
    w1 = jax.random.uniform(k1, (_K, _N1), jnp.float32, -lim1, lim1)
    b1 = jax.random.uniform(k2, (1, _N1), jnp.float32, -lim1, lim1)
    w2 = jax.random.uniform(k3, (_N1, _N2), jnp.float32, -lim2, lim2)
    b2 = jax.random.uniform(k4, (1, _N2), jnp.float32, -lim2, lim2)
    return w1, b1, w2, b2


if __name__ == "__main__":
    key = jax.random.PRNGKey(0)
    kx, kp = jax.random.split(key)

    # phase-1 output feature map: (B, C, H, W) = (2, 46, 4, 4) -> flattens to 736
    x = jax.random.normal(kx, (2, 46, 4, 4), dtype=jnp.float32)
    w1, b1, w2, b2 = init_params(kp)

    # one-time fused-weight prep (would live alongside model setup in practice)
    w12, b12 = fuse_head_params(w1, b1, w2, b2)

    out = jax.block_until_ready(expnet_p2_forward(x, w12, b12))
    assert out.shape == (2, 8) and out.dtype == jnp.float32

    # plain-JAX f32 reference of the original (un-fused) two-Linear head
    xf = x.reshape(x.shape[0], -1)
    h_ref = jnp.dot(xf, w1, precision=jax.lax.Precision.HIGHEST) + b1
    ref = jnp.dot(h_ref, w2, precision=jax.lax.Precision.HIGHEST) + b2
    assert jnp.allclose(out, ref, atol=2e-3, rtol=2e-3)

    print("KERNEL_OK")
</pallas_src>

<mosaic_0001>
module attributes {stable_mosaic.version = 11 : i64} {
  func.func @_head_kernel(%arg0: i32, %arg1: memref<8x736xf32, #tpu.memory_space<vmem>>, %arg2: memref<736x8xf32, #tpu.memory_space<vmem>>, %arg3: memref<1x8xf32, #tpu.memory_space<vmem>>, %arg4: memref<8x8xf32, #tpu.memory_space<vmem>>) attributes {dimension_semantics = [#tpu.dimension_semantics<parallel>], iteration_bounds = array<i64: 1>, scalar_prefetch = 0 : i64, scratch_operands = 0 : i64, tpu.core_type = #tpu.core_type<tc>, window_params = [{transform_indices = @transform_0, window_bounds = array<i64: 8, 736>}, {pipeline_mode = #tpu.pipeline_mode<synchronous>, transform_indices = @transform_1, window_bounds = array<i64: 736, 8>}, {pipeline_mode = #tpu.pipeline_mode<synchronous>, transform_indices = @transform_2, window_bounds = array<i64: 1, 8>}, {transform_indices = @transform_3, window_bounds = array<i64: 8, 8>}]} {
    %c0 = arith.constant 0 : index
    %c0_0 = arith.constant 0 : index
    %0 = vector.load %arg1[%c0, %c0_0] : memref<8x736xf32, #tpu.memory_space<vmem>>, vector<8x736xf32>
    %c0_1 = arith.constant 0 : index
    %c0_2 = arith.constant 0 : index
    %1 = vector.load %arg2[%c0_1, %c0_2] : memref<736x8xf32, #tpu.memory_space<vmem>>, vector<736x8xf32>
    %cst = arith.constant dense<0.000000e+00> : vector<8x8xf32>
    %2 = tpu.matmul %0, %1, %cst {dimension_numbers = #tpu.dot_dimension_numbers<[1], [0], [0], [1], [0, 0, 1, 1], [], []>} : vector<8x736xf32>, vector<736x8xf32>, vector<8x8xf32> -> vector<8x8xf32>
    %c0_3 = arith.constant 0 : index
    %c0_4 = arith.constant 0 : index
    %3 = vector.load %arg3[%c0_3, %c0_4] : memref<1x8xf32, #tpu.memory_space<vmem>>, vector<1x8xf32>
    %4 = vector.broadcast %3 : vector<1x8xf32> to vector<8x8xf32>
    %5 = arith.addf %2, %4 : vector<8x8xf32>
    %c0_5 = arith.constant 0 : index
    %c0_6 = arith.constant 0 : index
    %6 = vector.load %arg4[%c0_5, %c0_6] : memref<8x8xf32, #tpu.memory_space<vmem>>, vector<8x8xf32>
    tpu.vector_store %arg4[%c0_5, %c0_6], %5 {strides = array<i32>} : memref<8x8xf32, #tpu.memory_space<vmem>>, vector<8x8xf32>,
    return
  }
  func.func @transform_0(%arg0: i32) -> (i32, i32) {
    %c0_i32 = arith.constant 0 : i32
    %c0_i32_0 = arith.constant 0 : i32
    return %arg0, %c0_i32 : i32, i32
  }
  func.func @transform_1(%arg0: i32) -> (i32, i32) {
    %c0_i32 = arith.constant 0 : i32
    %c0_i32_0 = arith.constant 0 : i32
    %c0_i32_1 = arith.constant 0 : i32
    return %c0_i32, %c0_i32_0 : i32, i32
  }
  func.func @transform_2(%arg0: i32) -> (i32, i32) {
    %c0_i32 = arith.constant 0 : i32
    %c0_i32_0 = arith.constant 0 : i32
    %c0_i32_1 = arith.constant 0 : i32
    return %c0_i32, %c0_i32_0 : i32, i32
  }
  func.func @transform_3(%arg0: i32) -> (i32, i32) {
    %c0_i32 = arith.constant 0 : i32
    %c0_i32_0 = arith.constant 0 : i32
    return %arg0, %c0_i32 : i32, i32
  }
}

</mosaic_0001>

<llo_original>
// kernel: tpu_custom_call.1
$region0: #{tpu_custom_call.1}
  #allocation0 [shape = 'u32[]', space=smem, size = 0x4, offset = 0x4, fixed_abs, tag = 'smem constant byte address 0x4 - core index']
  #allocation1 [shape = 'u32[72,128]{1,0:T(1,128)}', space=vmem, size = 0x9000, scoped, tag = 'internal scratch']
  %s0 = inlined_call_operand.vmem [shape: f32[8,736], index: 0, kind: input, shape index: {}]
  %s1 = inlined_call_operand.vmem [shape: f32[736,8], index: 1, kind: input, shape index: {}]
  %s2 = inlined_call_operand.vmem [shape: f32[1,8], index: 2, kind: input, shape index: {}]
  %s3 = inlined_call_operand.hbm [shape: f32[8,8], index: 3, kind: output, shape index: {}]
  %s4 = sld [smem:[#allocation0]]
  $region22: #{tpu_custom_call.1} parent=0
    _
  %s6 = ssub.s32 1, %s4
  %s7 = scalar_select 0, %s6, %s4
  $region1: #{tpu_custom_call.1} parent=0
    #allocation2 [shape = 'u8[4096]{0}', space=vmem, size = 0x1000, scoped, tag = 'output window, operand 0, single buffered']
    #allocation3 [shape = 's32[1]{0}', space=sflag, size = 0x4, scoped, tag = 'scoped memory for tpu_custom_call.1']
    %8 = vsyncpa [#allocation3], 0
    // Predicated region
    $region2: #{tpu_custom_call.1} parent=1 // pred_check
      _
    $region3: #{tpu_custom_call.1} parent=1 // pred_check_branch
      %10 = sbr.rel (0) target = $region5
    $region4: #{tpu_custom_call.1} parent=1 // pred_region
      _
    $region5: #{tpu_custom_call.1} parent=1 // pred_fallthru
      _
    // Predicated region
    $region6: #{tpu_custom_call.1} parent=1 // pred_check
      _
    $region7: #{tpu_custom_call.1} parent=1 // pred_check_branch
      %12 = sbr.rel (0) target = $region9
    $region8: #{tpu_custom_call.1} parent=1 // pred_region
      _
    $region9: #{tpu_custom_call.1} parent=1 // pred_fallthru
      _
    // Predicated region
    $region10: #{tpu_custom_call.1} parent=1 // pred_check
      _
    $region11: #{tpu_custom_call.1} parent=1 // pred_check_branch
      %14 = sbr.rel (0) target = $region13
    $region12: #{tpu_custom_call.1} parent=1 // pred_region
      _
    $region13: #{tpu_custom_call.1} parent=1 // pred_fallthru
      _
    %v15 = vld [vmem:[%s0] sm:$0xff]
    %v16 = vld [vmem:[%s0 + $0x8] sm:$0xff]
    %v17 = vld [vmem:[%s0 + $0x10] sm:$0xff]
    %v18 = vld [vmem:[%s0 + $0x18] sm:$0xff]
    %v19 = vld [vmem:[%s0 + $0x20] sm:$0xff]
    %v20 = vld [vmem:[%s0 + $0x28] sm:$0xff]
    %v21 = vld [vmem:[%s1] sm:$0xff]
    %v22 = vld [vmem:[%s1 + $0x8] sm:$0xff]
    %v23 = vld [vmem:[%s1 + $0x10] sm:$0xff]
    %v24 = vld [vmem:[%s1 + $0x18] sm:$0xff]
    %v25 = vld [vmem:[%s1 + $0x20] sm:$0xff]
    %v26 = vld [vmem:[%s1 + $0x28] sm:$0xff]
    %v27 = vld [vmem:[%s1 + $0x30] sm:$0xff]
    %v28 = vld [vmem:[%s1 + $0x38] sm:$0xff]
    %v29 = vld [vmem:[%s1 + $0x40] sm:$0xff]
    %v30 = vld [vmem:[%s1 + $0x48] sm:$0xff]
    %v31 = vld [vmem:[%s1 + $0x50] sm:$0xff]
    %v32 = vld [vmem:[%s1 + $0x58] sm:$0xff]
    %v33 = vld [vmem:[%s1 + $0x60] sm:$0xff]
    %v34 = vld [vmem:[%s1 + $0x68] sm:$0xff]
    %v35 = vld [vmem:[%s1 + $0x70] sm:$0xff]
    %v36 = vld [vmem:[%s1 + $0x78] sm:$0xff]
    %v37 = vld [vmem:[%s1 + $0x80] sm:$0xff]
    %v38 = vld [vmem:[%s1 + $0x88] sm:$0xff]
    %v39 = vld [vmem:[%s1 + $0x90] sm:$0xff]
    %v40 = vld [vmem:[%s1 + $0x98] sm:$0xff]
    %v41 = vld [vmem:[%s1 + $0xa0] sm:$0xff]
    %v42 = vld [vmem:[%s1 + $0xa8] sm:$0xff]
    %v43 = vld [vmem:[%s1 + $0xb0] sm:$0xff]
    %v44 = vld [vmem:[%s1 + $0xb8] sm:$0xff]
    %v45 = vld [vmem:[%s1 + $0xc0] sm:$0xff]
    %v46 = vld [vmem:[%s1 + $0xc8] sm:$0xff]
    %v47 = vld [vmem:[%s1 + $0xd0] sm:$0xff]
    %v48 = vld [vmem:[%s1 + $0xd8] sm:$0xff]
    %v49 = vld [vmem:[%s1 + $0xe0] sm:$0xff]
    %v50 = vld [vmem:[%s1 + $0xe8] sm:$0xff]
    %v51 = vld [vmem:[%s1 + $0xf0] sm:$0xff]
    %v52 = vld [vmem:[%s1 + $0xf8] sm:$0xff]
    %v53 = vld [vmem:[%s1 + $0x100] sm:$0xff]
    %v54 = vld [vmem:[%s1 + $0x108] sm:$0xff]
    %v55 = vld [vmem:[%s1 + $0x110] sm:$0xff]
    %v56 = vld [vmem:[%s1 + $0x118] sm:$0xff]
    %v57 = vld [vmem:[%s1 + $0x120] sm:$0xff]
    %v58 = vld [vmem:[%s1 + $0x128] sm:$0xff]
    %v59 = vld [vmem:[%s1 + $0x130] sm:$0xff]
    %v60 = vld [vmem:[%s1 + $0x138] sm:$0xff]
    %v61 = vld [vmem:[%s1 + $0x140] sm:$0xff]
    %v62 = vld [vmem:[%s1 + $0x148] sm:$0xff]
    %v63 = vld [vmem:[%s1 + $0x150] sm:$0xff]
    %v64 = vld [vmem:[%s1 + $0x158] sm:$0xff]
    %v65 = vld [vmem:[%s1 + $0x160] sm:$0xff]
    %v66 = vld [vmem:[%s1 + $0x168] sm:$0xff]
    %v67 = vld [vmem:[%s1 + $0x170] sm:$0xff]
    %v68 = vld [vmem:[%s1 + $0x178] sm:$0xff]
    %v69 = vld [vmem:[%s1 + $0x180] sm:$0xff]
    %v70 = vld [vmem:[%s1 + $0x188] sm:$0xff]
    %v71 = vld [vmem:[%s1 + $0x190] sm:$0xff]
    %v72 = vld [vmem:[%s1 + $0x198] sm:$0xff]
    %v73 = vld [vmem:[%s1 + $0x1a0] sm:$0xff]
    %v74 = vld [vmem:[%s1 + $0x1a8] sm:$0xff]
    %v75 = vld [vmem:[%s1 + $0x1b0] sm:$0xff]
    %v76 = vld [vmem:[%s1 + $0x1b8] sm:$0xff]
    %v77 = vld [vmem:[%s1 + $0x1c0] sm:$0xff]
    %v78 = vld [vmem:[%s1 + $0x1c8] sm:$0xff]
    %v79 = vld [vmem:[%s1 + $0x1d0] sm:$0xff]
    %v80 = vld [vmem:[%s1 + $0x1d8] sm:$0xff]
    %v81 = vld [vmem:[%s1 + $0x1e0] sm:$0xff]
    %v82 = vld [vmem:[%s1 + $0x1e8] sm:$0xff]
    %v83 = vld [vmem:[%s1 + $0x1f0] sm:$0xff]
    %v84 = vld [vmem:[%s1 + $0x1f8] sm:$0xff]
    %v85 = vld [vmem:[%s1 + $0x200] sm:$0xff]
    %v86 = vld [vmem:[%s1 + $0x208] sm:$0xff]
    %v87 = vld [vmem:[%s1 + $0x210] sm:$0xff]
    %v88 = vld [vmem:[%s1 + $0x218] sm:$0xff]
    %v89 = vld [vmem:[%s1 + $0x220] sm:$0xff]
    %v90 = vld [vmem:[%s1 + $0x228] sm:$0xff]
    %v91 = vld [vmem:[%s1 + $0x230] sm:$0xff]
    %v92 = vld [vmem:[%s1 + $0x238] sm:$0xff]
    %v93 = vld [vmem:[%s1 + $0x240] sm:$0xff]
    %v94 = vld [vmem:[%s1 + $0x248] sm:$0xff]
    %v95 = vld [vmem:[%s1 + $0x250] sm:$0xff]
    %v96 = vld [vmem:[%s1 + $0x258] sm:$0xff]
    %v97 = vld [vmem:[%s1 + $0x260] sm:$0xff]
    %v98 = vld [vmem:[%s1 + $0x268] sm:$0xff]
    %v99 = vld [vmem:[%s1 + $0x270] sm:$0xff]
    %v100 = vld [vmem:[%s1 + $0x278] sm:$0xff]
    %v101 = vld [vmem:[%s1 + $0x280] sm:$0xff]
    %v102 = vld [vmem:[%s1 + $0x288] sm:$0xff]
    %v103 = vld [vmem:[%s1 + $0x290] sm:$0xff]
    %v104 = vld [vmem:[%s1 + $0x298] sm:$0xff]
    %v105 = vld [vmem:[%s1 + $0x2a0] sm:$0xff]
    %v106 = vld [vmem:[%s1 + $0x2a8] sm:$0xff]
    %v107 = vld [vmem:[%s1 + $0x2b0] sm:$0xff]
    %v108 = vld [vmem:[%s1 + $0x2b8] sm:$0xff]
    %v109 = vld [vmem:[%s1 + $0x2c0] sm:$0xff]
    %v110 = vld [vmem:[%s1 + $0x2c8] sm:$0xff]
    %v111 = vld [vmem:[%s1 + $0x2d0] sm:$0xff]
    %v112 = vld [vmem:[%s1 + $0x2d8] sm:$0xff]
    %v113 = vld [vmem:[%s2] sm:$0x1]
    %v115 = vperm.slane %v113, 0
    %vm117 = vcmask 785408
    %v119 = vsel %vm117, %v20, 0
    %121 = vmatpush.msra.mxu0 %v36
    %122 = vmatpush.msra.mxu0 %v35
    %123 = vmatpush.msra.mxu0 %v34
    %124 = vmatpush.msra.mxu0 %v33
    %125 = vmatpush.msra.mxu0 %v32
    %126 = vmatpush.msra.mxu0 %v31
    %127 = vmatpush.msra.mxu0 %v30
    %128 = vmatpush.msra.mxu0 %v29
    %129 = vmatpush.msra.mxu0 %v28
    %130 = vmatpush.msra.mxu0 %v27
    %131 = vmatpush.msra.mxu0 %v26
    %132 = vmatpush.msra.mxu0 %v25
    %133 = vmatpush.msra.mxu0 %v24
    %134 = vmatpush.msra.mxu0 %v23
    %135 = vmatpush.msra.mxu0 %v22
    %136 = vmatpush.msra.mxu0 %v21
    %137 = vmatmul.f32.gmra.mxu0 %v15
    %v138 = vpop.f32.mrf.mxu0
    %v139 = vadd.f32 %v115, %v138
    %140 = vdwg.mxu0
    %141 = vmatpush.msra.mxu0 %v52
    %142 = vmatpush.msra.mxu0 %v51
    %143 = vmatpush.msra.mxu0 %v50
    %144 = vmatpush.msra.mxu0 %v49
    %145 = vmatpush.msra.mxu0 %v48
    %146 = vmatpush.msra.mxu0 %v47
    %147 = vmatpush.msra.mxu0 %v46
    %148 = vmatpush.msra.mxu0 %v45
    %149 = vmatpush.msra.mxu0 %v44
    %150 = vmatpush.msra.mxu0 %v43
    %151 = vmatpush.msra.mxu0 %v42
    %152 = vmatpush.msra.mxu0 %v41
    %153 = vmatpush.msra.mxu0 %v40
    %154 = vmatpush.msra.mxu0 %v39
    %155 = vmatpush.msra.mxu0 %v38
    %156 = vmatpush.msra.mxu0 %v37
    %157 = vmatmul.f32.gmra.mxu0 %v16
    %v158 = vpop.f32.mrf.mxu0
    %v159 = vadd.f32 %v139, %v158
    %160 = vdwg.mxu0
    %161 = vmatpush.msra.mxu0 %v68
    %162 = vmatpush.msra.mxu0 %v67
    %163 = vmatpush.msra.mxu0 %v66
    %164 = vmatpush.msra.mxu0 %v65
    %165 = vmatpush.msra.mxu0 %v64
    %166 = vmatpush.msra.mxu0 %v63
    %167 = vmatpush.msra.mxu0 %v62
    %168 = vmatpush.msra.mxu0 %v61
    %169 = vmatpush.msra.mxu0 %v60
    %170 = vmatpush.msra.mxu0 %v59
    %171 = vmatpush.msra.mxu0 %v58
    %172 = vmatpush.msra.mxu0 %v57
    %173 = vmatpush.msra.mxu0 %v56
    %174 = vmatpush.msra.mxu0 %v55
    %175 = vmatpush.msra.mxu0 %v54
    %176 = vmatpush.msra.mxu0 %v53
    %177 = vmatmul.f32.gmra.mxu0 %v17
    %v178 = vpop.f32.mrf.mxu0
    %v179 = vadd.f32 %v159, %v178
    %180 = vdwg.mxu0
    %181 = vmatpush.msra.mxu0 %v84
    %182 = vmatpush.msra.mxu0 %v83
    %183 = vmatpush.msra.mxu0 %v82
    %184 = vmatpush.msra.mxu0 %v81
    %185 = vmatpush.msra.mxu0 %v80
    %186 = vmatpush.msra.mxu0 %v79
    %187 = vmatpush.msra.mxu0 %v78
    %188 = vmatpush.msra.mxu0 %v77
    %189 = vmatpush.msra.mxu0 %v76
    %190 = vmatpush.msra.mxu0 %v75
    %191 = vmatpush.msra.mxu0 %v74
    %192 = vmatpush.msra.mxu0 %v73
    %193 = vmatpush.msra.mxu0 %v72
    %194 = vmatpush.msra.mxu0 %v71
    %195 = vmatpush.msra.mxu0 %v70
    %196 = vmatpush.msra.mxu0 %v69
    %197 = vmatmul.f32.gmra.mxu0 %v18
    %v198 = vpop.f32.mrf.mxu0
    %v199 = vadd.f32 %v179, %v198
    %200 = vdwg.mxu0
    %201 = vmatpush.msra.mxu0 %v100
    %202 = vmatpush.msra.mxu0 %v99
    %203 = vmatpush.msra.mxu0 %v98
    %204 = vmatpush.msra.mxu0 %v97
    %205 = vmatpush.msra.mxu0 %v96
    %206 = vmatpush.msra.mxu0 %v95
    %207 = vmatpush.msra.mxu0 %v94
    %208 = vmatpush.msra.mxu0 %v93
    %209 = vmatpush.msra.mxu0 %v92
    %210 = vmatpush.msra.mxu0 %v91
    %211 = vmatpush.msra.mxu0 %v90
    %212 = vmatpush.msra.mxu0 %v89
    %213 = vmatpush.msra.mxu0 %v88
    %214 = vmatpush.msra.mxu0 %v87
    %215 = vmatpush.msra.mxu0 %v86
    %216 = vmatpush.msra.mxu0 %v85
    %217 = vmatmul.f32.gmra.mxu0 %v19
    %v218 = vpop.f32.mrf.mxu0
    %v219 = vadd.f32 %v199, %v218
    %220 = vdwg.mxu0
    %221 = vmatpush.msra.mxu0 0.0
    %222 = vmatpush.msra.mxu0 0.0
    %223 = vmatpush.msra.mxu0 0.0
    %224 = vmatpush.msra.mxu0 0.0
    %225 = vmatpush.msra.mxu0 %v112
    %226 = vmatpush.msra.mxu0 %v111
    %227 = vmatpush.msra.mxu0 %v110
    %228 = vmatpush.msra.mxu0 %v109
    %229 = vmatpush.msra.mxu0 %v108
    %230 = vmatpush.msra.mxu0 %v107
    %231 = vmatpush.msra.mxu0 %v106
    %232 = vmatpush.msra.mxu0 %v105
    %233 = vmatpush.msra.mxu0 %v104
    %234 = vmatpush.msra.mxu0 %v103
    %235 = vmatpush.msra.mxu0 %v102
    %236 = vmatpush.msra.mxu0 %v101
    %237 = vmatmul.f32.gmra.mxu0 %v119
    %v238 = vpop.f32.mrf.mxu0
    %v239 = vadd.f32 %v219, %v238
    %240 = vdwg.mxu0
    %vm241 = vcmask 64512
    %242 = vst.msk [vmem:[#allocation2] sm:$0xff] %vm241, %v239
    // Predicated region
    $region14: #{tpu_custom_call.1} parent=1 // pred_check
      _
    $region15: #{tpu_custom_call.1} parent=1 // pred_check_branch
      %244 = sbr.rel (0) target = $region17
    $region16: #{tpu_custom_call.1} parent=1 // pred_region
      %246 = vsyncadd [#allocation3], 0
      %s248 = sshll.u32 [#allocation2], 4
      %s249 = int_to_ptr.vmem [resolvable:$true] %s248
      %s250 = sshll.u32 %s3, 4
      %s251 = int_to_ptr.hbm [resolvable:$true] %s250
      %253 = dma.vmem_to_hbm [thread:$0]  %s249, 128, %s251, [#allocation3]
    $region17: #{tpu_custom_call.1} parent=1 // pred_fallthru
      _
    // Predicated region
    $region18: #{tpu_custom_call.1} parent=1 // pred_check
      _
    $region19: #{tpu_custom_call.1} parent=1 // pred_check_branch
      %255 = sbr.rel (0) target = $region21
    $region20: #{tpu_custom_call.1} parent=1 // pred_region
      %257 = dma.done [#allocation3], 128
    $region21: #{tpu_custom_call.1} parent=1 // pred_fallthru
      _
    %258 = vsyncpa [#allocation3], 1

</llo_original>
